<compile_context>
chip_gen: v5e
topology: v5e:2x2
jax: 0.10.0
libtpu: 0.0.40
codegen_flags: <defaults>
</compile_context>

<pallas_src>
import jax
import jax.numpy as jnp
from jax import lax
from jax.experimental import pallas as pl
from jax.experimental.pallas import tpu as pltpu


OUT_W = 8  # output slab lanes (first 2 are the real logits)


def _round_up(x, m):
    return (x + m - 1) // m * m


def _choose_tm(n):
    """Pick a batch tile: multiple of 8, minimal padding, prefer >=2 grid steps."""
    n8 = _round_up(max(n, 1), 8)
    if n8 <= 256:
        return n8  # one small tile covers the whole (tiny) batch
    best_tm, best_key = None, None
    for cand in (256, 512, 1024, 2048):
        n_pad = _round_up(n, cand)
        steps = n_pad // cand
        pad = n_pad - n
        # minimize padded rows; then prefer >=2 steps (v7x megacore); then bigger tiles
        key = (pad, 0 if steps >= 2 else 1, -cand)
        if best_key is None or key < best_key:
            best_tm, best_key = cand, key
    return best_tm


def dummy_model_kernel(x_ref, w1_ref, p_ref, out_ref):
    # Conv-as-matmul on the MXU: [TM, K] x [OC, K], contracting K (=300).
    h = lax.dot_general(
        x_ref[...], w1_ref[...],
        dimension_numbers=(((1,), (1,)), ((), ())),
        preferred_element_type=jnp.float32,
    )                                                   # [TM, OC]
    oc = h.shape[1]                                     # 8

    # conv bias + ReLU (VPU).  p_ref row 0 = conv bias.
    h = jnp.maximum(h + p_ref[0:1, :oc], 0.0)

    # nn.Dropout() in eval mode is the identity.
    # TODO(synk): training-mode dropout (p=0.5 mask + 2x scale via pltpu.prng_*) not implemented.

    # Tiny 8->2 linear on the VPU/XLU:
    #   p_ref row 1 = lin_w[0, :], row 2 = lin_w[1, :], row 3 = lin bias (lanes 0..1).
    y0 = jnp.sum(h * p_ref[1:2, :oc], axis=1, keepdims=True)   # [TM, 1]
    y1 = jnp.sum(h * p_ref[2:3, :oc], axis=1, keepdims=True)   # [TM, 1]

    # Narrow (TM, 8) output slab: logits in lanes 0 and 1, rest zero.
    lanes = lax.broadcasted_iota(jnp.int32, out_ref.shape, 1)
    out = jnp.where(lanes == 0, y0, 0.0) + jnp.where(lanes == 1, y1, 0.0)
    out_ref[...] = out + p_ref[3:4, :]                  # + linear bias (zero-padded)


def dummy_model_forward(x_nchw, conv_w, conv_b, lin_w, lin_b, *, tm=None):
    N, C, H, W = x_nchw.shape
    OC, IC, KH, KW = conv_w.shape
    # The conv output must be spatially 1x1 for this kernel (full-image conv).
    assert (H, W) == (KH, KW), "input spatial dims must equal the conv kernel size"
    assert C == IC, "input channel mismatch"

    K = C * H * W                         # 3*10*10 = 300 (no padding in HBM)

    # Lane-dense activations [N, K] and conv weight [OC, K] — no HBM-side pad.
    x_flat = x_nchw.reshape(N, K).astype(jnp.float32)
    w1 = conv_w.reshape(OC, K).astype(jnp.float32)

    # Packed small-parameter operand: one tiny (8, 8) tile instead of 4 DMAs.
    params = jnp.zeros((8, OUT_W), jnp.float32)
    params = params.at[0, :OC].set(conv_b.astype(jnp.float32))        # conv bias
    params = params.at[1, :OC].set(lin_w[0, :].astype(jnp.float32))   # w2 row 0
    params = params.at[2, :OC].set(lin_w[1, :].astype(jnp.float32))   # w2 row 1
    params = params.at[3, :lin_b.shape[0]].set(lin_b.astype(jnp.float32))  # lin bias

    # Batch tiling: adaptive tile, minimal padding, >=2 grid steps when possible.
    if tm is None:
        tm = _choose_tm(N)
    tm = max(8, _round_up(min(tm, _round_up(N, 8)), 8))
    n_pad = _round_up(N, tm)
    if n_pad != N:
        x_flat = jnp.pad(x_flat, ((0, n_pad - N), (0, 0)))
    grid = (n_pad // tm,)

    cost = pl.CostEstimate(
        flops=2 * n_pad * K * OC,
        transcendentals=0,
        bytes_accessed=(n_pad * K + OC * K + 8 * OUT_W + n_pad * OUT_W) * 4,
    )

    out_padded = pl.pallas_call(
        dummy_model_kernel,
        out_shape=jax.ShapeDtypeStruct((n_pad, OUT_W), jnp.float32),
        grid_spec=pltpu.PrefetchScalarGridSpec(
            num_scalar_prefetch=0,
            grid=grid,
            in_specs=[
                pl.BlockSpec((tm, K), lambda i: (i, 0)),       # x tile (pipelined)
                pl.BlockSpec((OC, K), lambda i: (0, 0)),       # conv weight (resident)
                pl.BlockSpec((8, OUT_W), lambda i: (0, 0)),    # packed biases / lin weight
            ],
            out_specs=pl.BlockSpec((tm, OUT_W), lambda i: (i, 0)),
        ),
        compiler_params=pltpu.CompilerParams(
            dimension_semantics=("parallel",),
        ),
        cost_estimate=cost,
    )(x_flat, w1, params)

    # Strip batch padding and the lane padding of the output slab.
    return out_padded[:N, :2]


def reference_forward(x_nchw, conv_w, conv_b, lin_w, lin_b):
    # pure-JAX reference (eval mode): conv2d valid -> relu -> flatten -> linear
    y = lax.conv_general_dilated(
        x_nchw, conv_w, window_strides=(1, 1), padding="VALID",
        dimension_numbers=("NCHW", "OIHW", "NCHW"))
    y = y + conv_b.reshape(1, -1, 1, 1)
    y = jnp.maximum(y, 0.0)
    y = y.reshape(y.shape[0], -1)
    return y @ lin_w.T + lin_b


if __name__ == "__main__":
    key = jax.random.PRNGKey(0)
    kx, kw1, kb1, kw2, kb2 = jax.random.split(key, 5)

    # Input consistent with the module: N=2, C=3, H=W=10 (conv output 1x1).
    x = jax.random.normal(kx, (2, 3, 10, 10), dtype=jnp.float32)

    # Deterministic parameter init (shapes from DummyModel.__init__).
    conv_w = jax.random.normal(kw1, (8, 3, 10, 10), dtype=jnp.float32) * 0.05
    conv_b = jax.random.normal(kb1, (8,), dtype=jnp.float32) * 0.05
    lin_w = jax.random.normal(kw2, (2, 8), dtype=jnp.float32) * 0.1
    lin_b = jax.random.normal(kb2, (2,), dtype=jnp.float32) * 0.1

    out = dummy_model_forward(x, conv_w, conv_b, lin_w, lin_b)
    out = jax.block_until_ready(out)

    ref = reference_forward(x, conv_w, conv_b, lin_w, lin_b)
    assert out.shape == (2, 2)
    assert jnp.allclose(out, ref, atol=1e-4, rtol=1e-4), (out, ref)

    print("KERNEL_OK")
</pallas_src>

<mosaic_0001>
module attributes {stable_mosaic.version = 11 : i64} {
  func.func @dummy_model_kernel(%arg0: i32, %arg1: memref<8x300xf32, #tpu.memory_space<vmem>>, %arg2: memref<8x300xf32, #tpu.memory_space<vmem>>, %arg3: memref<8x8xf32, #tpu.memory_space<vmem>>, %arg4: memref<8x8xf32, #tpu.memory_space<vmem>>) attributes {dimension_semantics = [#tpu.dimension_semantics<parallel>], iteration_bounds = array<i64: 1>, scalar_prefetch = 0 : i64, scratch_operands = 0 : i64, tpu.core_type = #tpu.core_type<tc>, window_params = [{transform_indices = @transform_0, window_bounds = array<i64: 8, 300>}, {pipeline_mode = #tpu.pipeline_mode<synchronous>, transform_indices = @transform_1, window_bounds = array<i64: 8, 300>}, {pipeline_mode = #tpu.pipeline_mode<synchronous>, transform_indices = @transform_2, window_bounds = array<i64: 8, 8>}, {transform_indices = @transform_3, window_bounds = array<i64: 8, 8>}]} {
    %c0 = arith.constant 0 : index
    %c0_0 = arith.constant 0 : index
    %0 = vector.load %arg1[%c0, %c0_0] : memref<8x300xf32, #tpu.memory_space<vmem>>, vector<8x300xf32>
    %c0_1 = arith.constant 0 : index
    %c0_2 = arith.constant 0 : index
    %1 = vector.load %arg2[%c0_1, %c0_2] : memref<8x300xf32, #tpu.memory_space<vmem>>, vector<8x300xf32>
    %cst = arith.constant dense<0.000000e+00> : vector<8x8xf32>
    %2 = tpu.matmul %0, %1, %cst {dimension_numbers = #tpu.dot_dimension_numbers<[1], [1], [0], [0], [0, 0, 1, 0], [], []>} : vector<8x300xf32>, vector<8x300xf32>, vector<8x8xf32> -> vector<8x8xf32>
    %c0_3 = arith.constant 0 : index
    %c0_4 = arith.constant 0 : index
    %3 = vector.load %arg3[%c0_3, %c0_4] : memref<8x8xf32, #tpu.memory_space<vmem>>, vector<1x8xf32>
    %4 = vector.broadcast %3 : vector<1x8xf32> to vector<8x8xf32>
    %5 = arith.addf %2, %4 : vector<8x8xf32>
    %cst_5 = arith.constant 0.000000e+00 : f32
    %6 = vector.broadcast %cst_5 : f32 to vector<8x8xf32>
    %7 = arith.maximumf %5, %6 : vector<8x8xf32>
    %c1 = arith.constant 1 : index
    %c0_6 = arith.constant 0 : index
    %8 = vector.load %arg3[%c1, %c0_6] : memref<8x8xf32, #tpu.memory_space<vmem>>, vector<1x8xf32>
    %9 = vector.broadcast %8 : vector<1x8xf32> to vector<8x8xf32>
    %10 = arith.mulf %7, %9 : vector<8x8xf32>
    %cst_7 = arith.constant dense<0.000000e+00> : vector<8xf32>
    %11 = vector.multi_reduction <add>, %10, %cst_7 [1] : vector<8x8xf32> to vector<8xf32>
    %12 = vector.shape_cast %11 : vector<8xf32> to vector<8x1xf32>
    %c2 = arith.constant 2 : index
    %c0_8 = arith.constant 0 : index
    %13 = vector.load %arg3[%c2, %c0_8] : memref<8x8xf32, #tpu.memory_space<vmem>>, vector<1x8xf32>
    %14 = vector.broadcast %13 : vector<1x8xf32> to vector<8x8xf32>
    %15 = arith.mulf %7, %14 : vector<8x8xf32>
    %cst_9 = arith.constant dense<0.000000e+00> : vector<8xf32>
    %16 = vector.multi_reduction <add>, %15, %cst_9 [1] : vector<8x8xf32> to vector<8xf32>
    %17 = vector.shape_cast %16 : vector<8xf32> to vector<8x1xf32>
    %18 = tpu.iota {dimensions = array<i32: 1>} : vector<8x8xi32>
    %c0_i32 = arith.constant 0 : i32
    %19 = vector.broadcast %c0_i32 : i32 to vector<8x8xi32>
    %20 = arith.cmpi eq, %18, %19 : vector<8x8xi32>
    %cst_10 = arith.constant 0.000000e+00 : f32
    %21 = vector.shape_cast %12 : vector<8x1xf32> to vector<8x1xf32>
    %22 = vector.broadcast %21 : vector<8x1xf32> to vector<8x8xf32>
    %23 = vector.broadcast %cst_10 : f32 to vector<8x8xf32>
    %24 = arith.select %20, %22, %23 : vector<8x8xi1>, vector<8x8xf32>
    %c1_i32 = arith.constant 1 : i32
    %25 = vector.broadcast %c1_i32 : i32 to vector<8x8xi32>
    %26 = arith.cmpi eq, %18, %25 : vector<8x8xi32>
    %cst_11 = arith.constant 0.000000e+00 : f32
    %27 = vector.shape_cast %17 : vector<8x1xf32> to vector<8x1xf32>
    %28 = vector.broadcast %27 : vector<8x1xf32> to vector<8x8xf32>
    %29 = vector.broadcast %cst_11 : f32 to vector<8x8xf32>
    %30 = arith.select %26, %28, %29 : vector<8x8xi1>, vector<8x8xf32>
    %31 = arith.addf %24, %30 : vector<8x8xf32>
    %c3 = arith.constant 3 : index
    %c0_12 = arith.constant 0 : index
    %32 = vector.load %arg3[%c3, %c0_12] : memref<8x8xf32, #tpu.memory_space<vmem>>, vector<1x8xf32>
    %33 = vector.broadcast %32 : vector<1x8xf32> to vector<8x8xf32>
    %34 = arith.addf %31, %33 : vector<8x8xf32>
    %c0_13 = arith.constant 0 : index
    %c0_14 = arith.constant 0 : index
    %35 = vector.load %arg4[%c0_13, %c0_14] : memref<8x8xf32, #tpu.memory_space<vmem>>, vector<8x8xf32>
    tpu.vector_store %arg4[%c0_13, %c0_14], %34 {strides = array<i32>} : memref<8x8xf32, #tpu.memory_space<vmem>>, vector<8x8xf32>,
    return
  }
  func.func @transform_0(%arg0: i32) -> (i32, i32) {
    %c0_i32 = arith.constant 0 : i32
    %c0_i32_0 = arith.constant 0 : i32
    return %arg0, %c0_i32 : i32, i32
  }
  func.func @transform_1(%arg0: i32) -> (i32, i32) {
    %c0_i32 = arith.constant 0 : i32
    %c0_i32_0 = arith.constant 0 : i32
    %c0_i32_1 = arith.constant 0 : i32
    return %c0_i32, %c0_i32_0 : i32, i32
  }
  func.func @transform_2(%arg0: i32) -> (i32, i32) {
    %c0_i32 = arith.constant 0 : i32
    %c0_i32_0 = arith.constant 0 : i32
    %c0_i32_1 = arith.constant 0 : i32
    return %c0_i32, %c0_i32_0 : i32, i32
  }
  func.func @transform_3(%arg0: i32) -> (i32, i32) {
    %c0_i32 = arith.constant 0 : i32
    %c0_i32_0 = arith.constant 0 : i32
    return %arg0, %c0_i32 : i32, i32
  }
}

</mosaic_0001>

<llo_original>
// kernel: tpu_custom_call.1
$region0: #{tpu_custom_call.1}
  #allocation0 [shape = 'u32[]', space=smem, size = 0x4, offset = 0x4, fixed_abs, tag = 'smem constant byte address 0x4 - core index']
  #allocation1 [shape = 'u32[72,128]{1,0:T(1,128)}', space=vmem, size = 0x9000, scoped, tag = 'internal scratch']
  %s0 = inlined_call_operand.hbm [shape: f32[8,300], index: 0, kind: input, shape index: {}]
  %s1 = inlined_call_operand.hbm [shape: f32[8,300], index: 1, kind: input, shape index: {}]
  %s2 = inlined_call_operand.hbm [shape: f32[8,8], index: 2, kind: input, shape index: {}]
  %s3 = inlined_call_operand.hbm [shape: f32[8,8], index: 3, kind: output, shape index: {}]
  %s4 = sld [smem:[#allocation0]]
  $region34: #{tpu_custom_call.1} parent=0
    _
  %s6 = ssub.s32 1, %s4
  %s7 = scalar_select 0, %s6, %s4
  $region1: #{tpu_custom_call.1} parent=0
    #allocation2 [shape = 'u8[12288]{0}', space=vmem, size = 0x3000, scoped, tag = 'input window, operand 0, single buffered']
    #allocation3 [shape = 's32[1]{0}', space=sflag, size = 0x4, scoped, tag = 'scoped memory for tpu_custom_call.1']
    #allocation4 [shape = 's32[1]{0}', space=sflag, size = 0x4, scoped, tag = 'scoped memory for tpu_custom_call.1']
    #allocation5 [shape = 'u8[12288]{0}', space=vmem, size = 0x3000, scoped, tag = 'input window, operand 1, single buffered']
    #allocation6 [shape = 's32[1]{0}', space=sflag, size = 0x4, scoped, tag = 'scoped memory for tpu_custom_call.1']
    #allocation7 [shape = 'u8[4096]{0}', space=vmem, size = 0x1000, scoped, tag = 'input window, operand 2, single buffered']
    #allocation8 [shape = 'u8[4096]{0}', space=vmem, size = 0x1000, scoped, tag = 'output window, operand 0, single buffered']
    %8 = vsyncpa [#allocation3], 0
    %9 = vsyncpa [#allocation6], 0
    %10 = vsyncpa [#allocation4], 0
    // Predicated region
    $region2: #{tpu_custom_call.1} parent=1 // pred_check
      _
    $region3: #{tpu_custom_call.1} parent=1 // pred_check_branch
      %12 = sbr.rel (0) target = $region5
    $region4: #{tpu_custom_call.1} parent=1 // pred_region
      %14 = vsyncadd [#allocation3], 0
      %s16 = sshll.u32 %s0, 4
      %s17 = int_to_ptr.hbm [resolvable:$true] %s16
      %s18 = sshll.u32 [#allocation2], 4
      %s19 = int_to_ptr.vmem [resolvable:$true] %s18
      %21 = dma.hbm_to_vmem [thread:$0]  %s17, 384, %s19, [#allocation3]
    $region5: #{tpu_custom_call.1} parent=1 // pred_fallthru
      _
    // Predicated region
    $region6: #{tpu_custom_call.1} parent=1 // pred_check
      _
    $region7: #{tpu_custom_call.1} parent=1 // pred_check_branch
      %23 = sbr.rel (0) target = $region9
    $region8: #{tpu_custom_call.1} parent=1 // pred_region
      %25 = vsyncadd [#allocation6], 0
      %s27 = sshll.u32 %s1, 4
      %s28 = int_to_ptr.hbm [resolvable:$true] %s27
      %s29 = sshll.u32 [#allocation5], 4
      %s30 = int_to_ptr.vmem [resolvable:$true] %s29
      %32 = dma.hbm_to_vmem [thread:$0]  %s28, 384, %s30, [#allocation6]
    $region9: #{tpu_custom_call.1} parent=1 // pred_fallthru
      _
    // Predicated region
    $region10: #{tpu_custom_call.1} parent=1 // pred_check
      _
    $region11: #{tpu_custom_call.1} parent=1 // pred_check_branch
      %34 = sbr.rel (0) target = $region13
    $region12: #{tpu_custom_call.1} parent=1 // pred_region
      %36 = vsyncadd [#allocation6], 0
      %s38 = sshll.u32 %s2, 4
      %s39 = int_to_ptr.hbm [resolvable:$true] %s38
      %s40 = sshll.u32 [#allocation7], 4
      %s41 = int_to_ptr.vmem [resolvable:$true] %s40
      %43 = dma.hbm_to_vmem [thread:$0]  %s39, 128, %s41, [#allocation6]
    $region13: #{tpu_custom_call.1} parent=1 // pred_fallthru
      _
    // Predicated region
    $region14: #{tpu_custom_call.1} parent=1 // pred_check
      _
    $region15: #{tpu_custom_call.1} parent=1 // pred_check_branch
      %45 = sbr.rel (0) target = $region17
    $region16: #{tpu_custom_call.1} parent=1 // pred_region
      %47 = dma.done [#allocation3], 384
    $region17: #{tpu_custom_call.1} parent=1 // pred_fallthru
      _
    // Predicated region
    $region18: #{tpu_custom_call.1} parent=1 // pred_check
      _
    $region19: #{tpu_custom_call.1} parent=1 // pred_check_branch
      %49 = sbr.rel (0) target = $region21
    $region20: #{tpu_custom_call.1} parent=1 // pred_region
      %51 = dma.done [#allocation6], 384
    $region21: #{tpu_custom_call.1} parent=1 // pred_fallthru
      _
    // Predicated region
    $region22: #{tpu_custom_call.1} parent=1 // pred_check
      _
    $region23: #{tpu_custom_call.1} parent=1 // pred_check_branch
      %53 = sbr.rel (0) target = $region25
    $region24: #{tpu_custom_call.1} parent=1 // pred_region
      %55 = dma.done [#allocation6], 128
    $region25: #{tpu_custom_call.1} parent=1 // pred_fallthru
      _
    %v56 = vld [vmem:[#allocation2] sm:$0xff]
    %v57 = vld [vmem:[#allocation2 + $0x8] sm:$0xff]
    %v58 = vld [vmem:[#allocation2 + $0x10] sm:$0xff]
    %v59 = vld [vmem:[#allocation5] sm:$0xff]
    %v60 = vld [vmem:[#allocation5 + $0x8] sm:$0xff]
    %v61 = vld [vmem:[#allocation5 + $0x10] sm:$0xff]
    %v62 = vld [vmem:[#allocation7] sm:$0x1]
    %v63 = vperm.slane %v62, 0
    %vm64 = vcmask 359424
    %v66 = vsel %vm64, %v58, 0
    %v69 = vsel %vm64, %v61, 0
    %71 = vmatpush.xpose.msra.mxu0 0.0
    %72 = vmatpush.xpose.msra.mxu0 0.0
    %73 = vmatpush.xpose.msra.mxu0 0.0
    %74 = vmatpush.xpose.msra.mxu0 0.0
    %75 = vmatpush.xpose.msra.mxu0 0.0
    %76 = vmatpush.xpose.msra.mxu0 0.0
    %77 = vmatpush.xpose.msra.mxu0 0.0
    %78 = vmatpush.xpose.msra.mxu0 0.0
    %79 = vmatpush.xpose.msra.mxu0 0.0
    %80 = vmatpush.xpose.msra.mxu0 0.0
    %81 = vmatpush.xpose.msra.mxu0 0.0
    %82 = vmatpush.xpose.msra.mxu0 0.0
    %83 = vmatpush.xpose.msra.mxu0 0.0
    %84 = vmatpush.xpose.msra.mxu0 0.0
    %85 = vmatpush.xpose.msra.mxu0 0.0
    %86 = vmatpush.xpose.msra.mxu0 %v59
    %87 = vmatmul.f32.gmra.mxu0 %v56
    %v88 = vpop.f32.mrf.mxu0
    %v89 = vadd.f32 %v63, %v88
    %90 = vdwg.mxu0
    %91 = vmatpush.xpose.msra.mxu0 0.0
    %92 = vmatpush.xpose.msra.mxu0 0.0
    %93 = vmatpush.xpose.msra.mxu0 0.0
    %94 = vmatpush.xpose.msra.mxu0 0.0
    %95 = vmatpush.xpose.msra.mxu0 0.0
    %96 = vmatpush.xpose.msra.mxu0 0.0
    %97 = vmatpush.xpose.msra.mxu0 0.0
    %98 = vmatpush.xpose.msra.mxu0 0.0
    %99 = vmatpush.xpose.msra.mxu0 0.0
    %100 = vmatpush.xpose.msra.mxu0 0.0
    %101 = vmatpush.xpose.msra.mxu0 0.0
    %102 = vmatpush.xpose.msra.mxu0 0.0
    %103 = vmatpush.xpose.msra.mxu0 0.0
    %104 = vmatpush.xpose.msra.mxu0 0.0
    %105 = vmatpush.xpose.msra.mxu0 0.0
    %106 = vmatpush.xpose.msra.mxu0 %v60
    %107 = vmatmul.f32.gmra.mxu0 %v57
    %v108 = vpop.f32.mrf.mxu0
    %v109 = vadd.f32 %v89, %v108
    %110 = vdwg.mxu0
    %111 = vmatpush.xpose.msra.mxu0 0.0
    %112 = vmatpush.xpose.msra.mxu0 0.0
    %113 = vmatpush.xpose.msra.mxu0 0.0
    %114 = vmatpush.xpose.msra.mxu0 0.0
    %115 = vmatpush.xpose.msra.mxu0 0.0
    %116 = vmatpush.xpose.msra.mxu0 0.0
    %117 = vmatpush.xpose.msra.mxu0 0.0
    %118 = vmatpush.xpose.msra.mxu0 0.0
    %119 = vmatpush.xpose.msra.mxu0 0.0
    %120 = vmatpush.xpose.msra.mxu0 0.0
    %121 = vmatpush.xpose.msra.mxu0 0.0
    %122 = vmatpush.xpose.msra.mxu0 0.0
    %123 = vmatpush.xpose.msra.mxu0 0.0
    %124 = vmatpush.xpose.msra.mxu0 0.0
    %125 = vmatpush.xpose.msra.mxu0 0.0
    %126 = vmatpush.xpose.msra.mxu0 %v69
    %127 = vmatmul.f32.gmra.mxu0 %v66
    %v128 = vpop.f32.mrf.mxu0
    %v129 = vadd.f32 %v109, %v128
    %130 = vdwg.mxu0
    %v131 = vmax.f32 %v129, 0.0
    %v132 = vld [vmem:[#allocation7 + $0x1] sm:$0x1]
    %v133 = vperm.slane %v132, 0
    %v134 = vmul.f32 %v131, %v133
    %vm135 = vcmask 64512
    %v136 = vsel %vm135, %v134, 0.0
    %137 = vadd.xlane.f32.xlu0 %v136
    %v138 = vpop.xlane.xlu0 %137
    %v139 = vld [vmem:[#allocation7 + $0x2] sm:$0x1]
    %v140 = vperm.slane %v139, 0
    %v141 = vmul.f32 %v131, %v140
    %v142 = vsel %vm135, %v141, 0.0
    %143 = vadd.xlane.f32.xlu0 %v142
    %v144 = vpop.xlane.xlu0 %143
    %v145 = vlaneseq
    %v146 = vand.u32 %v145, 127
    %vm147 = vcmp.eq.s32.totalorder %v146, 0
    %v148 = vsel %vm147, %v138, 0.0
    %vm149 = vcmp.eq.s32.totalorder %v146, 1
    %v150 = vsel %vm149, %v144, 0.0
    %v151 = vadd.f32 %v148, %v150
    %v152 = vld [vmem:[#allocation7 + $0x3] sm:$0x1]
    %v153 = vperm.slane %v152, 0
    %v154 = vadd.f32 %v151, %v153
    %155 = vst.msk [vmem:[#allocation8] sm:$0xff] %vm135, %v154
    // Predicated region
    $region26: #{tpu_custom_call.1} parent=1 // pred_check
      _
    $region27: #{tpu_custom_call.1} parent=1 // pred_check_branch
      %157 = sbr.rel (0) target = $region29
    $region28: #{tpu_custom_call.1} parent=1 // pred_region
      %159 = vsyncadd [#allocation4], 0
      %s161 = sshll.u32 [#allocation8], 4
      %s162 = int_to_ptr.vmem [resolvable:$true] %s161
      %s163 = sshll.u32 %s3, 4
      %s164 = int_to_ptr.hbm [resolvable:$true] %s163
      %166 = dma.vmem_to_hbm [thread:$0]  %s162, 128, %s164, [#allocation4]
    $region29: #{tpu_custom_call.1} parent=1 // pred_fallthru
      _
    // Predicated region
    $region30: #{tpu_custom_call.1} parent=1 // pred_check
      _
    $region31: #{tpu_custom_call.1} parent=1 // pred_check_branch
      %168 = sbr.rel (0) target = $region33
    $region32: #{tpu_custom_call.1} parent=1 // pred_region
      %170 = dma.done [#allocation4], 128
    $region33: #{tpu_custom_call.1} parent=1 // pred_fallthru
      _
    %171 = vsyncpa [#allocation3], 1
    %172 = vsyncpa [#allocation6], 1
    %173 = vsyncpa [#allocation4], 1

</llo_original>
